<compile_context>
chip_gen: v6e
topology: v6e:2x2x1
jax: 0.10.0
libtpu: 0.0.40
codegen_flags: <defaults>
</compile_context>

<pallas_src>
import numpy as np
import jax
import jax.numpy as jnp
from jax.experimental import pallas as pl
from jax.experimental.pallas import tpu as pltpu


# --------------------------------- kernel -----------------------------------
def attn_decoder_kernel(tok_ref,                     # scalar prefetch (SMEM); used only by index_maps
                        emb_ref, h0_ref, enc_ref, ws_enc_ref,
                        wih_ref, whh_f_ref, whh_b_ref, bih_ref, bhh_ref,
                        wd_w_ref, wd_b_ref, out_w_ref, out_b_ref,
                        logp_ref, attn_ref, hid_ref,
                        h_scr):
    H = whh_f_ref.shape[0]                           # per-direction hidden size
    t = pl.program_id(0)

    # initialize the recurrent carry from the provided hidden state at step 0
    @pl.when(t == 0)
    def _():
        h_scr[...] = h0_ref[...]

    # embedding row (gathered by the BlockSpec index_map from the token id) + ReLU
    x = jnp.maximum(emb_ref[0], 0.0)                 # (1, H)
    h = h_scr[...]                                   # (1, 2H) = [h_f | h_b]
    h_f = h[:, :H]
    h_b = h[:, H:]

    # bidirectional GRU cell (single timestep), dense weights only.
    # gate column layout of gi / biases: [r_f z_f n_f | r_b z_b n_b]
    gi = jnp.dot(x, wih_ref[...], preferred_element_type=jnp.float32) + bih_ref[...]      # (1, 6H)
    gh_f = jnp.dot(h_f, whh_f_ref[...], preferred_element_type=jnp.float32) + bhh_ref[:, :3 * H]
    gh_b = jnp.dot(h_b, whh_b_ref[...], preferred_element_type=jnp.float32) + bhh_ref[:, 3 * H:]

    def gru_update(gi_d, gh_d, h_d):
        r = jax.nn.sigmoid(gi_d[:, :H] + gh_d[:, :H])
        z = jax.nn.sigmoid(gi_d[:, H:2 * H] + gh_d[:, H:2 * H])
        n = jnp.tanh(gi_d[:, 2 * H:] + r * gh_d[:, 2 * H:])
        return (1.0 - z) * n + z * h_d

    d_f = gru_update(gi[:, :3 * H], gh_f, h_f)       # (1, H)
    d_b = gru_update(gi[:, 3 * H:], gh_b, h_b)       # (1, H)

    # build the lane-packed new hidden [d_f | d_b] directly in the carry buffer
    # (avoids an in-kernel lane concatenate)
    h_scr[:, :H] = d_f
    h_scr[:, H:] = d_b
    dec = h_scr[...]                                 # (1, 2H) new hidden, both directions
    hid_ref[...] = dec                               # constant-index output: flushed once at the end

    # 'gen' attention: score = ws(enc) @ dec^T ; ws_enc precomputed in the wrapper
    scores = jax.lax.dot_general(dec, ws_enc_ref[...], (((1,), (1,)), ((), ())),
                                 preferred_element_type=jnp.float32)   # (1, S)
    m = jnp.max(scores, axis=-1, keepdims=True)
    e = jnp.exp(scores - m)
    alpha = e / jnp.sum(e, axis=-1, keepdims=True)   # exact divide kept for reference parity
    attn_ref[0] = alpha
    c_t = jnp.dot(alpha, enc_ref[...], preferred_element_type=jnp.float32)   # (1, 2H)

    # h_t = tanh(wd(cat(c_t, dec))): split the cat into two matmuls on wd^T row halves
    wd_w = wd_w_ref[...]                             # (4H, H): rows [c_t features | dec features]
    h_t = jnp.tanh(jnp.dot(c_t, wd_w[:2 * H], preferred_element_type=jnp.float32)
                   + jnp.dot(dec, wd_w[2 * H:], preferred_element_type=jnp.float32)
                   + wd_b_ref[...])                  # (1, H)

    # vocab projection + log-softmax
    # TODO(synk): tile over V with an online max/sum-exp for production vocab sizes.
    logits = jnp.dot(h_t, out_w_ref[...], preferred_element_type=jnp.float32) + out_b_ref[...]
    lmax = jnp.max(logits, axis=-1, keepdims=True)
    shifted = logits - lmax
    logp_ref[0] = shifted - jnp.log(jnp.sum(jnp.exp(shifted), axis=-1, keepdims=True))


# ------------------------- param layout preparation --------------------------
def prepare_kernel_params(p):
    """Torch-layout params -> fused / transposed kernel layout (done once)."""
    V, H = p["emb"].shape
    f32 = lambda a: a.astype(jnp.float32)
    return {
        # embedding table reshaped so a (1,1,H) block gathers exactly one row
        "emb3": f32(p["emb"]).reshape(V, 1, H),
        # input->hidden fused over both directions: (H, 6H), cols [rf zf nf | rb zb nb]
        "wih": jnp.concatenate([f32(p["w_ih_f"]).T, f32(p["w_ih_b"]).T], axis=1),
        "bih": jnp.concatenate([f32(p["b_ih_f"]), f32(p["b_ih_b"])])[None, :],
        # hidden->hidden kept dense per direction (no block-diagonal zeros)
        "whh_f": f32(p["w_hh_f"]).T,                 # (H, 3H)
        "whh_b": f32(p["w_hh_b"]).T,                 # (H, 3H)
        "bhh": jnp.concatenate([f32(p["b_hh_f"]), f32(p["b_hh_b"])])[None, :],
        "wd_w": f32(p["wd_w"]).T, "wd_b": f32(p["wd_b"])[None, :],
        "out_w": f32(p["out_w"]).T, "out_b": f32(p["out_b"])[None, :],
    }


# --------------------------------- wrappers -----------------------------------
def _resident_spec(shape):
    """Full-array block whose index never changes -> DMA'd once, VMEM-resident."""
    n = len(shape)
    return pl.BlockSpec(shape, lambda t, tok, _n=n: (0,) * _n)


def attn_decoder_decode(tokens, hidden, enc_states, torch_params, kparams=None):
    """Run T fused decode steps (teacher-forced input tokens) in one pallas_call.

    tokens: (T,) int32; hidden: (2,1,H); enc_states: (S, 2H).
    Returns (log_probs (T,V), final hidden (2,1,H), attn_weights (T,S));
    step t equals AttnDecoderRNN.forward(tokens[t], hidden_t, enc_states)."""
    if kparams is None:
        kparams = prepare_kernel_params(torch_params)
    V, H = torch_params["emb"].shape
    S = enc_states.shape[0]
    T = int(tokens.shape[0])

    enc = enc_states.astype(jnp.float32)
    # step-invariant attention key projection, hoisted out of the kernel
    ws_enc = enc @ torch_params["ws_w"].astype(jnp.float32).T + torch_params["ws_b"].astype(jnp.float32)
    h0 = hidden.astype(jnp.float32).reshape(1, 2 * H)    # [h_fwd | h_bwd]

    grid_spec = pltpu.PrefetchScalarGridSpec(
        num_scalar_prefetch=1,                           # tokens live in SMEM
        grid=(T,),
        in_specs=[
            pl.BlockSpec((1, 1, H), lambda t, tok: (tok[t], 0, 0)),   # embedding row gather
            _resident_spec((1, 2 * H)),                               # h0
            _resident_spec((S, 2 * H)),                               # enc
            _resident_spec((S, 2 * H)),                               # ws_enc
            _resident_spec((H, 6 * H)),                               # wih
            _resident_spec((H, 3 * H)),                               # whh_f
            _resident_spec((H, 3 * H)),                               # whh_b
            _resident_spec((1, 6 * H)),                               # bih
            _resident_spec((1, 6 * H)),                               # bhh
            _resident_spec((4 * H, H)),                               # wd_w
            _resident_spec((1, H)),                                   # wd_b
            _resident_spec((H, V)),                                   # out_w
            _resident_spec((1, V)),                                   # out_b
        ],
        out_specs=[
            pl.BlockSpec((1, 1, V), lambda t, tok: (t, 0, 0)),        # logp per step
            pl.BlockSpec((1, 1, S), lambda t, tok: (t, 0, 0)),        # attn per step
            _resident_spec((1, 2 * H)),                               # final hidden
        ],
        scratch_shapes=[pltpu.VMEM((1, 2 * H), jnp.float32)],         # recurrent carry
    )

    logp, attn, hid = pl.pallas_call(
        attn_decoder_kernel,
        grid_spec=grid_spec,
        out_shape=(jax.ShapeDtypeStruct((T, 1, V), jnp.float32),
                   jax.ShapeDtypeStruct((T, 1, S), jnp.float32),
                   jax.ShapeDtypeStruct((1, 2 * H), jnp.float32)),
        compiler_params=pltpu.CompilerParams(dimension_semantics=("arbitrary",)),
        # TODO(synk): alias h0 -> hid via input_output_aliases to drop the extra
        # HBM copy of the recurrent state.
    )(tokens.astype(jnp.int32),
      kparams["emb3"], h0, enc, ws_enc,
      kparams["wih"], kparams["whh_f"], kparams["whh_b"], kparams["bih"], kparams["bhh"],
      kparams["wd_w"], kparams["wd_b"], kparams["out_w"], kparams["out_b"])

    return logp.reshape(T, V), hid.reshape(2, 1, H), attn.reshape(T, S)


def attn_decoder_forward(token_id, hidden, enc_states, torch_params, kparams=None):
    """Single decode step == AttnDecoderRNN.forward. token_id: () int32."""
    tokens = jnp.reshape(token_id, (1,)).astype(jnp.int32)
    logp, hid, attn = attn_decoder_decode(tokens, hidden, enc_states, torch_params, kparams)
    return logp, hid, attn           # (1,V), (2,1,H), (1,S)


# ----------------------- pure-JAX reference (torch semantics) ----------------
def reference_forward(token_id, hidden, enc, p):
    H = p["emb"].shape[1]
    x = jnp.maximum(p["emb"][token_id].reshape(1, H), 0.0)

    def gru_cell(x, h, w_ih, w_hh, b_ih, b_hh):
        gi = x @ w_ih.T + b_ih
        gh = h @ w_hh.T + b_hh
        i_r, i_z, i_n = jnp.split(gi, 3, axis=1)
        h_r, h_z, h_n = jnp.split(gh, 3, axis=1)
        r = jax.nn.sigmoid(i_r + h_r)
        z = jax.nn.sigmoid(i_z + h_z)
        n = jnp.tanh(i_n + r * h_n)
        return (1.0 - z) * n + z * h

    h_f = gru_cell(x, hidden[0], p["w_ih_f"], p["w_hh_f"], p["b_ih_f"], p["b_hh_f"])
    h_b = gru_cell(x, hidden[1], p["w_ih_b"], p["w_hh_b"], p["b_ih_b"], p["b_hh_b"])
    dec_out = jnp.concatenate([h_f, h_b], axis=1)            # (1, 2H)
    hidden_out = jnp.stack([h_f, h_b], axis=0)               # (2, 1, H)

    ws_enc = enc @ p["ws_w"].T + p["ws_b"]                   # (S, 2H)
    score = ws_enc @ dec_out.T                               # (S, 1)
    alpha = jax.nn.softmax(score.T, axis=1)                  # (1, S)
    c_t = alpha @ enc                                        # (1, 2H)
    h_t = jnp.tanh(jnp.concatenate([c_t, dec_out], axis=1) @ p["wd_w"].T + p["wd_b"])
    out_word = jax.nn.log_softmax(h_t @ p["out_w"].T + p["out_b"], axis=1)
    return out_word, hidden_out, alpha


def reference_decode(tokens, hidden, enc, p):
    logps, attns = [], []
    h = hidden
    for t in range(tokens.shape[0]):
        lp, h, a = reference_forward(tokens[t], h, enc, p)
        logps.append(lp)
        attns.append(a)
    return jnp.concatenate(logps, axis=0), h, jnp.concatenate(attns, axis=0)


def init_params(key, hidden, vocab):
    ks = jax.random.split(key, 15)
    s = 1.0 / np.sqrt(hidden)
    u = lambda k, shape: jax.random.uniform(k, shape, jnp.float32, -s, s)
    H, V = hidden, vocab
    return {
        "emb":    jax.random.normal(ks[0], (V, H), jnp.float32),
        "w_ih_f": u(ks[1], (3 * H, H)), "w_hh_f": u(ks[2], (3 * H, H)),
        "b_ih_f": u(ks[3], (3 * H,)),   "b_hh_f": u(ks[4], (3 * H,)),
        "w_ih_b": u(ks[5], (3 * H, H)), "w_hh_b": u(ks[6], (3 * H, H)),
        "b_ih_b": u(ks[7], (3 * H,)),   "b_hh_b": u(ks[8], (3 * H,)),
        "ws_w":   u(ks[9], (2 * H, 2 * H)),  "ws_b": u(ks[10], (2 * H,)),
        "wd_w":   u(ks[11], (H, 4 * H)),     "wd_b": u(ks[12], (H,)),
        "out_w":  u(ks[13], (V, H)),         "out_b": u(ks[14], (V,)),
    }


if __name__ == "__main__":
    HIDDEN, VOCAB, SEQ, STEPS = 32, 50, 8, 4
    key = jax.random.PRNGKey(0)
    kp, ki, ke, kh, kt = jax.random.split(key, 5)

    params = init_params(kp, HIDDEN, VOCAB)
    kparams = prepare_kernel_params(params)
    token = jax.random.randint(ki, (), 0, VOCAB, dtype=jnp.int32)
    tokens = jax.random.randint(kt, (STEPS,), 0, VOCAB, dtype=jnp.int32)
    hidden0 = jax.random.normal(kh, (2, 1, HIDDEN), jnp.float32)          # prev decoder hidden
    enc_states = jax.random.normal(ke, (SEQ, 2 * HIDDEN), jnp.float32)    # encoder outputs

    # ---- single step (exact AttnDecoderRNN.forward semantics) ----
    logp, hid, attn = attn_decoder_forward(token, hidden0, enc_states, params, kparams)
    jax.block_until_ready((logp, hid, attn))
    logp_r, hid_r, attn_r = reference_forward(token, hidden0, enc_states, params)
    np.testing.assert_allclose(np.asarray(logp), np.asarray(logp_r), atol=1e-5, rtol=1e-5)
    np.testing.assert_allclose(np.asarray(hid), np.asarray(hid_r), atol=1e-5, rtol=1e-5)
    np.testing.assert_allclose(np.asarray(attn), np.asarray(attn_r), atol=1e-5, rtol=1e-5)
    assert logp.shape == (1, VOCAB) and hid.shape == (2, 1, HIDDEN) and attn.shape == (1, SEQ)

    # ---- fused multi-step decode (weights VMEM-resident across the T-step grid) ----
    logp_s, hid_s, attn_s = attn_decoder_decode(tokens, hidden0, enc_states, params, kparams)
    jax.block_until_ready((logp_s, hid_s, attn_s))
    logp_sr, hid_sr, attn_sr = reference_decode(tokens, hidden0, enc_states, params)
    np.testing.assert_allclose(np.asarray(logp_s), np.asarray(logp_sr), atol=1e-5, rtol=1e-5)
    np.testing.assert_allclose(np.asarray(hid_s), np.asarray(hid_sr), atol=1e-5, rtol=1e-5)
    np.testing.assert_allclose(np.asarray(attn_s), np.asarray(attn_sr), atol=1e-5, rtol=1e-5)
    assert logp_s.shape == (STEPS, VOCAB) and attn_s.shape == (STEPS, SEQ)

    print("KERNEL_OK")
</pallas_src>

<mosaic_0001>
module attributes {stable_mosaic.version = 11 : i64} {
  func.func @attn_decoder_kernel(%arg0: i32, %arg1: memref<1xi32, #tpu.memory_space<smem>>, %arg2: memref<1x1x32xf32, #tpu.memory_space<vmem>>, %arg3: memref<1x64xf32, #tpu.memory_space<vmem>>, %arg4: memref<8x64xf32, #tpu.memory_space<vmem>>, %arg5: memref<8x64xf32, #tpu.memory_space<vmem>>, %arg6: memref<32x192xf32, #tpu.memory_space<vmem>>, %arg7: memref<32x96xf32, #tpu.memory_space<vmem>>, %arg8: memref<32x96xf32, #tpu.memory_space<vmem>>, %arg9: memref<1x192xf32, #tpu.memory_space<vmem>>, %arg10: memref<1x192xf32, #tpu.memory_space<vmem>>, %arg11: memref<128x32xf32, #tpu.memory_space<vmem>>, %arg12: memref<1x32xf32, #tpu.memory_space<vmem>>, %arg13: memref<32x50xf32, #tpu.memory_space<vmem>>, %arg14: memref<1x50xf32, #tpu.memory_space<vmem>>, %arg15: memref<1x1x50xf32, #tpu.memory_space<vmem>>, %arg16: memref<1x1x8xf32, #tpu.memory_space<vmem>>, %arg17: memref<1x64xf32, #tpu.memory_space<vmem>>, %arg18: memref<1x64xf32, #tpu.memory_space<vmem>>) attributes {dimension_semantics = [#tpu.dimension_semantics<arbitrary>], iteration_bounds = array<i64: 1>, scalar_prefetch = 1 : i64, scratch_operands = 1 : i64, tpu.core_type = #tpu.core_type<tc>, window_params = [{transform_indices = @transform_0, window_bounds = array<i64: 1, 1, 32>}, {pipeline_mode = #tpu.pipeline_mode<synchronous>, transform_indices = @transform_1, window_bounds = array<i64: 1, 64>}, {pipeline_mode = #tpu.pipeline_mode<synchronous>, transform_indices = @transform_2, window_bounds = array<i64: 8, 64>}, {pipeline_mode = #tpu.pipeline_mode<synchronous>, transform_indices = @transform_3, window_bounds = array<i64: 8, 64>}, {pipeline_mode = #tpu.pipeline_mode<synchronous>, transform_indices = @transform_4, window_bounds = array<i64: 32, 192>}, {pipeline_mode = #tpu.pipeline_mode<synchronous>, transform_indices = @transform_5, window_bounds = array<i64: 32, 96>}, {pipeline_mode = #tpu.pipeline_mode<synchronous>, transform_indices = @transform_6, window_bounds = array<i64: 32, 96>}, {pipeline_mode = #tpu.pipeline_mode<synchronous>, transform_indices = @transform_7, window_bounds = array<i64: 1, 192>}, {pipeline_mode = #tpu.pipeline_mode<synchronous>, transform_indices = @transform_8, window_bounds = array<i64: 1, 192>}, {pipeline_mode = #tpu.pipeline_mode<synchronous>, transform_indices = @transform_9, window_bounds = array<i64: 128, 32>}, {pipeline_mode = #tpu.pipeline_mode<synchronous>, transform_indices = @transform_10, window_bounds = array<i64: 1, 32>}, {pipeline_mode = #tpu.pipeline_mode<synchronous>, transform_indices = @transform_11, window_bounds = array<i64: 32, 50>}, {pipeline_mode = #tpu.pipeline_mode<synchronous>, transform_indices = @transform_12, window_bounds = array<i64: 1, 50>}, {transform_indices = @transform_13, window_bounds = array<i64: 1, 1, 50>}, {transform_indices = @transform_14, window_bounds = array<i64: 1, 1, 8>}, {pipeline_mode = #tpu.pipeline_mode<synchronous>, transform_indices = @transform_15, window_bounds = array<i64: 1, 64>}]} {
    %c0_i32 = arith.constant 0 : i32
    %0 = arith.cmpi eq, %arg0, %c0_i32 : i32
    %1 = arith.extui %0 : i1 to i32
    %c0_i32_0 = arith.constant 0 : i32
    %2 = arith.cmpi ne, %1, %c0_i32_0 : i32
    scf.if %2 {
      %c0_59 = arith.constant 0 : index
      %c0_60 = arith.constant 0 : index
      %122 = vector.load %arg3[%c0_59, %c0_60] : memref<1x64xf32, #tpu.memory_space<vmem>>, vector<1x64xf32>
      %c0_61 = arith.constant 0 : index
      %c0_62 = arith.constant 0 : index
      %123 = vector.load %arg18[%c0_61, %c0_62] : memref<1x64xf32, #tpu.memory_space<vmem>>, vector<1x64xf32>
      tpu.vector_store %arg18[%c0_61, %c0_62], %122 {strides = array<i32>} : memref<1x64xf32, #tpu.memory_space<vmem>>, vector<1x64xf32>,
    } else {
    }
    %c0 = arith.constant 0 : index
    %c0_1 = arith.constant 0 : index
    %c0_2 = arith.constant 0 : index
    %3 = vector.load %arg2[%c0, %c0_1, %c0_2] : memref<1x1x32xf32, #tpu.memory_space<vmem>>, vector<1x1x32xf32>
    %4 = vector.shape_cast %3 : vector<1x1x32xf32> to vector<1x32xf32>
    %cst = arith.constant 0.000000e+00 : f32
    %5 = vector.broadcast %cst : f32 to vector<1x32xf32>
    %6 = arith.maximumf %4, %5 : vector<1x32xf32>
    %c0_3 = arith.constant 0 : index
    %c0_4 = arith.constant 0 : index
    %7 = vector.load %arg18[%c0_3, %c0_4] : memref<1x64xf32, #tpu.memory_space<vmem>>, vector<1x64xf32>
    %8 = vector.extract_strided_slice %7 {offsets = [0, 0], sizes = [1, 32], strides = [1, 1]} : vector<1x64xf32> to vector<1x32xf32>
    %9 = vector.extract_strided_slice %7 {offsets = [0, 32], sizes = [1, 32], strides = [1, 1]} : vector<1x64xf32> to vector<1x32xf32>
    %c0_5 = arith.constant 0 : index
    %c0_6 = arith.constant 0 : index
    %10 = vector.load %arg6[%c0_5, %c0_6] : memref<32x192xf32, #tpu.memory_space<vmem>>, vector<32x192xf32>
    %cst_7 = arith.constant dense<0.000000e+00> : vector<1x192xf32>
    %11 = tpu.matmul %6, %10, %cst_7 {dimension_numbers = #tpu.dot_dimension_numbers<[1], [0], [0], [1], [0, 0, 1, 1], [], []>} : vector<1x32xf32>, vector<32x192xf32>, vector<1x192xf32> -> vector<1x192xf32>
    %c0_8 = arith.constant 0 : index
    %c0_9 = arith.constant 0 : index
    %12 = vector.load %arg9[%c0_8, %c0_9] : memref<1x192xf32, #tpu.memory_space<vmem>>, vector<1x192xf32>
    %13 = arith.addf %11, %12 : vector<1x192xf32>
    %c0_10 = arith.constant 0 : index
    %c0_11 = arith.constant 0 : index
    %14 = vector.load %arg7[%c0_10, %c0_11] : memref<32x96xf32, #tpu.memory_space<vmem>>, vector<32x96xf32>
    %cst_12 = arith.constant dense<0.000000e+00> : vector<1x96xf32>
    %15 = tpu.matmul %8, %14, %cst_12 {dimension_numbers = #tpu.dot_dimension_numbers<[1], [0], [0], [1], [0, 0, 1, 1], [], []>} : vector<1x32xf32>, vector<32x96xf32>, vector<1x96xf32> -> vector<1x96xf32>
    %c0_13 = arith.constant 0 : index
    %c0_14 = arith.constant 0 : index
    %16 = vector.load %arg10[%c0_13, %c0_14] : memref<1x192xf32, #tpu.memory_space<vmem>>, vector<1x96xf32>
    %17 = arith.addf %15, %16 : vector<1x96xf32>
    %c0_15 = arith.constant 0 : index
    %c0_16 = arith.constant 0 : index
    %18 = vector.load %arg8[%c0_15, %c0_16] : memref<32x96xf32, #tpu.memory_space<vmem>>, vector<32x96xf32>
    %cst_17 = arith.constant dense<0.000000e+00> : vector<1x96xf32>
    %19 = tpu.matmul %9, %18, %cst_17 {dimension_numbers = #tpu.dot_dimension_numbers<[1], [0], [0], [1], [0, 0, 1, 1], [], []>} : vector<1x32xf32>, vector<32x96xf32>, vector<1x96xf32> -> vector<1x96xf32>
    %c0_18 = arith.constant 0 : index
    %c96 = arith.constant 96 : index
    %20 = vector.load %arg10[%c0_18, %c96] : memref<1x192xf32, #tpu.memory_space<vmem>>, vector<1x96xf32>
    %21 = arith.addf %19, %20 : vector<1x96xf32>
    %22 = vector.extract_strided_slice %13 {offsets = [0, 0], sizes = [1, 96], strides = [1, 1]} : vector<1x192xf32> to vector<1x96xf32>
    %23 = vector.extract_strided_slice %22 {offsets = [0, 0], sizes = [1, 32], strides = [1, 1]} : vector<1x96xf32> to vector<1x32xf32>
    %24 = vector.extract_strided_slice %17 {offsets = [0, 0], sizes = [1, 32], strides = [1, 1]} : vector<1x96xf32> to vector<1x32xf32>
    %25 = arith.addf %23, %24 : vector<1x32xf32>
    %26 = arith.negf %25 : vector<1x32xf32>
    %27 = math.exp %26 : vector<1x32xf32>
    %cst_19 = arith.constant 1.000000e+00 : f32
    %28 = vector.broadcast %cst_19 : f32 to vector<1x32xf32>
    %29 = arith.addf %28, %27 : vector<1x32xf32>
    %30 = arith.divf %28, %29 : vector<1x32xf32>
    %31 = vector.extract_strided_slice %22 {offsets = [0, 32], sizes = [1, 32], strides = [1, 1]} : vector<1x96xf32> to vector<1x32xf32>
    %32 = vector.extract_strided_slice %17 {offsets = [0, 32], sizes = [1, 32], strides = [1, 1]} : vector<1x96xf32> to vector<1x32xf32>
    %33 = arith.addf %31, %32 : vector<1x32xf32>
    %34 = arith.negf %33 : vector<1x32xf32>
    %35 = math.exp %34 : vector<1x32xf32>
    %cst_20 = arith.constant 1.000000e+00 : f32
    %36 = vector.broadcast %cst_20 : f32 to vector<1x32xf32>
    %37 = arith.addf %36, %35 : vector<1x32xf32>
    %38 = arith.divf %36, %37 : vector<1x32xf32>
    %39 = vector.extract_strided_slice %22 {offsets = [0, 64], sizes = [1, 32], strides = [1, 1]} : vector<1x96xf32> to vector<1x32xf32>
    %40 = vector.extract_strided_slice %17 {offsets = [0, 64], sizes = [1, 32], strides = [1, 1]} : vector<1x96xf32> to vector<1x32xf32>
    %41 = arith.mulf %30, %40 : vector<1x32xf32>
    %42 = arith.addf %39, %41 : vector<1x32xf32>
    %43 = math.tanh %42 : vector<1x32xf32>
    %cst_21 = arith.constant 1.000000e+00 : f32
    %44 = vector.broadcast %cst_21 : f32 to vector<1x32xf32>
    %45 = arith.subf %44, %38 : vector<1x32xf32>
    %46 = arith.mulf %45, %43 : vector<1x32xf32>
    %47 = arith.mulf %38, %8 : vector<1x32xf32>
    %48 = arith.addf %46, %47 : vector<1x32xf32>
    %49 = vector.extract_strided_slice %13 {offsets = [0, 96], sizes = [1, 96], strides = [1, 1]} : vector<1x192xf32> to vector<1x96xf32>
    %50 = vector.extract_strided_slice %49 {offsets = [0, 0], sizes = [1, 32], strides = [1, 1]} : vector<1x96xf32> to vector<1x32xf32>
    %51 = vector.extract_strided_slice %21 {offsets = [0, 0], sizes = [1, 32], strides = [1, 1]} : vector<1x96xf32> to vector<1x32xf32>
    %52 = arith.addf %50, %51 : vector<1x32xf32>
    %53 = arith.negf %52 : vector<1x32xf32>
    %54 = math.exp %53 : vector<1x32xf32>
    %cst_22 = arith.constant 1.000000e+00 : f32
    %55 = vector.broadcast %cst_22 : f32 to vector<1x32xf32>
    %56 = arith.addf %55, %54 : vector<1x32xf32>
    %57 = arith.divf %55, %56 : vector<1x32xf32>
    %58 = vector.extract_strided_slice %49 {offsets = [0, 32], sizes = [1, 32], strides = [1, 1]} : vector<1x96xf32> to vector<1x32xf32>
    %59 = vector.extract_strided_slice %21 {offsets = [0, 32], sizes = [1, 32], strides = [1, 1]} : vector<1x96xf32> to vector<1x32xf32>
    %60 = arith.addf %58, %59 : vector<1x32xf32>
    %61 = arith.negf %60 : vector<1x32xf32>
    %62 = math.exp %61 : vector<1x32xf32>
    %cst_23 = arith.constant 1.000000e+00 : f32
    %63 = vector.broadcast %cst_23 : f32 to vector<1x32xf32>
    %64 = arith.addf %63, %62 : vector<1x32xf32>
    %65 = arith.divf %63, %64 : vector<1x32xf32>
    %66 = vector.extract_strided_slice %49 {offsets = [0, 64], sizes = [1, 32], strides = [1, 1]} : vector<1x96xf32> to vector<1x32xf32>
    %67 = vector.extract_strided_slice %21 {offsets = [0, 64], sizes = [1, 32], strides = [1, 1]} : vector<1x96xf32> to vector<1x32xf32>
    %68 = arith.mulf %57, %67 : vector<1x32xf32>
    %69 = arith.addf %66, %68 : vector<1x32xf32>
    %70 = math.tanh %69 : vector<1x32xf32>
    %cst_24 = arith.constant 1.000000e+00 : f32
    %71 = vector.broadcast %cst_24 : f32 to vector<1x32xf32>
    %72 = arith.subf %71, %65 : vector<1x32xf32>
    %73 = arith.mulf %72, %70 : vector<1x32xf32>
    %74 = arith.mulf %65, %9 : vector<1x32xf32>
    %75 = arith.addf %73, %74 : vector<1x32xf32>
    %c0_25 = arith.constant 0 : index
    %c0_26 = arith.constant 0 : index
    %76 = vector.load %arg18[%c0_25, %c0_26] : memref<1x64xf32, #tpu.memory_space<vmem>>, vector<1x32xf32>
    tpu.vector_store %arg18[%c0_25, %c0_26], %48 {strides = array<i32>} : memref<1x64xf32, #tpu.memory_space<vmem>>, vector<1x32xf32>,
    %c0_27 = arith.constant 0 : index
    %c32 = arith.constant 32 : index
    %77 = vector.load %arg18[%c0_27, %c32] : memref<1x64xf32, #tpu.memory_space<vmem>>, vector<1x32xf32>
    tpu.vector_store %arg18[%c0_27, %c32], %75 {strides = array<i32>} : memref<1x64xf32, #tpu.memory_space<vmem>>, vector<1x32xf32>,
    %c0_28 = arith.constant 0 : index
    %c0_29 = arith.constant 0 : index
    %78 = vector.load %arg18[%c0_28, %c0_29] : memref<1x64xf32, #tpu.memory_space<vmem>>, vector<1x64xf32>
    %c0_30 = arith.constant 0 : index
    %c0_31 = arith.constant 0 : index
    %79 = vector.load %arg17[%c0_30, %c0_31] : memref<1x64xf32, #tpu.memory_space<vmem>>, vector<1x64xf32>
    tpu.vector_store %arg17[%c0_30, %c0_31], %78 {strides = array<i32>} : memref<1x64xf32, #tpu.memory_space<vmem>>, vector<1x64xf32>,
    %c0_32 = arith.constant 0 : index
    %c0_33 = arith.constant 0 : index
    %80 = vector.load %arg5[%c0_32, %c0_33] : memref<8x64xf32, #tpu.memory_space<vmem>>, vector<8x64xf32>
    %cst_34 = arith.constant dense<0.000000e+00> : vector<1x8xf32>
    %81 = tpu.matmul %78, %80, %cst_34 {dimension_numbers = #tpu.dot_dimension_numbers<[1], [1], [0], [0], [0, 0, 1, 0], [], []>} : vector<1x64xf32>, vector<8x64xf32>, vector<1x8xf32> -> vector<1x8xf32>
    %cst_35 = arith.constant dense<0xFF800000> : vector<1xf32>
    %82 = vector.multi_reduction <maximumf>, %81, %cst_35 [1] : vector<1x8xf32> to vector<1xf32>
    %83 = vector.shape_cast %82 : vector<1xf32> to vector<1x1xf32>
    %84 = vector.broadcast %83 : vector<1x1xf32> to vector<1x8xf32>
    %85 = arith.subf %81, %84 : vector<1x8xf32>
    %86 = math.exp %85 : vector<1x8xf32>
    %cst_36 = arith.constant dense<0.000000e+00> : vector<1xf32>
    %87 = vector.multi_reduction <add>, %86, %cst_36 [1] : vector<1x8xf32> to vector<1xf32>
    %88 = vector.shape_cast %87 : vector<1xf32> to vector<1x1xf32>
    %89 = vector.broadcast %88 : vector<1x1xf32> to vector<1x8xf32>
    %90 = arith.divf %86, %89 : vector<1x8xf32>
    %c0_37 = arith.constant 0 : index
    %c0_38 = arith.constant 0 : index
    %c0_39 = arith.constant 0 : index
    %91 = vector.load %arg16[%c0_37, %c0_38, %c0_39] : memref<1x1x8xf32, #tpu.memory_space<vmem>>, vector<1x1x8xf32>
    %92 = vector.shape_cast %91 : vector<1x1x8xf32> to vector<1x8xf32>
    %93 = vector.shape_cast %90 : vector<1x8xf32> to vector<1x1x8xf32>
    tpu.vector_store %arg16[%c0_37, %c0_38, %c0_39], %93 {strides = array<i32>} : memref<1x1x8xf32, #tpu.memory_space<vmem>>, vector<1x1x8xf32>,
    %c0_40 = arith.constant 0 : index
    %c0_41 = arith.constant 0 : index
    %94 = vector.load %arg4[%c0_40, %c0_41] : memref<8x64xf32, #tpu.memory_space<vmem>>, vector<8x64xf32>
    %cst_42 = arith.constant dense<0.000000e+00> : vector<1x64xf32>
    %95 = tpu.matmul %90, %94, %cst_42 {dimension_numbers = #tpu.dot_dimension_numbers<[1], [0], [0], [1], [0, 0, 1, 1], [], []>} : vector<1x8xf32>, vector<8x64xf32>, vector<1x64xf32> -> vector<1x64xf32>
    %c0_43 = arith.constant 0 : index
    %c0_44 = arith.constant 0 : index
    %96 = vector.load %arg11[%c0_43, %c0_44] : memref<128x32xf32, #tpu.memory_space<vmem>>, vector<128x32xf32>
    %97 = vector.extract_strided_slice %96 {offsets = [0, 0], sizes = [64, 32], strides = [1, 1]} : vector<128x32xf32> to vector<64x32xf32>
    %cst_45 = arith.constant dense<0.000000e+00> : vector<1x32xf32>
    %98 = tpu.matmul %95, %97, %cst_45 {dimension_numbers = #tpu.dot_dimension_numbers<[1], [0], [0], [1], [0, 0, 1, 1], [], []>} : vector<1x64xf32>, vector<64x32xf32>, vector<1x32xf32> -> vector<1x32xf32>
    %99 = vector.extract_strided_slice %96 {offsets = [64, 0], sizes = [64, 32], strides = [1, 1]} : vector<128x32xf32> to vector<64x32xf32>
    %cst_46 = arith.constant dense<0.000000e+00> : vector<1x32xf32>
    %100 = tpu.matmul %78, %99, %cst_46 {dimension_numbers = #tpu.dot_dimension_numbers<[1], [0], [0], [1], [0, 0, 1, 1], [], []>} : vector<1x64xf32>, vector<64x32xf32>, vector<1x32xf32> -> vector<1x32xf32>
    %101 = arith.addf %98, %100 : vector<1x32xf32>
    %c0_47 = arith.constant 0 : index
    %c0_48 = arith.constant 0 : index
    %102 = vector.load %arg12[%c0_47, %c0_48] : memref<1x32xf32, #tpu.memory_space<vmem>>, vector<1x32xf32>
    %103 = arith.addf %101, %102 : vector<1x32xf32>
    %104 = math.tanh %103 : vector<1x32xf32>
    %c0_49 = arith.constant 0 : index
    %c0_50 = arith.constant 0 : index
    %105 = vector.load %arg13[%c0_49, %c0_50] : memref<32x50xf32, #tpu.memory_space<vmem>>, vector<32x50xf32>
    %cst_51 = arith.constant dense<0.000000e+00> : vector<1x50xf32>
    %106 = tpu.matmul %104, %105, %cst_51 {dimension_numbers = #tpu.dot_dimension_numbers<[1], [0], [0], [1], [0, 0, 1, 1], [], []>} : vector<1x32xf32>, vector<32x50xf32>, vector<1x50xf32> -> vector<1x50xf32>
    %c0_52 = arith.constant 0 : index
    %c0_53 = arith.constant 0 : index
    %107 = vector.load %arg14[%c0_52, %c0_53] : memref<1x50xf32, #tpu.memory_space<vmem>>, vector<1x50xf32>
    %108 = arith.addf %106, %107 : vector<1x50xf32>
    %cst_54 = arith.constant dense<0xFF800000> : vector<1xf32>
    %109 = vector.multi_reduction <maximumf>, %108, %cst_54 [1] : vector<1x50xf32> to vector<1xf32>
    %110 = vector.shape_cast %109 : vector<1xf32> to vector<1x1xf32>
    %111 = vector.broadcast %110 : vector<1x1xf32> to vector<1x50xf32>
    %112 = arith.subf %108, %111 : vector<1x50xf32>
    %113 = math.exp %112 : vector<1x50xf32>
    %cst_55 = arith.constant dense<0.000000e+00> : vector<1xf32>
    %114 = vector.multi_reduction <add>, %113, %cst_55 [1] : vector<1x50xf32> to vector<1xf32>
    %115 = vector.shape_cast %114 : vector<1xf32> to vector<1x1xf32>
    %116 = math.log %115 : vector<1x1xf32>
    %117 = vector.broadcast %116 : vector<1x1xf32> to vector<1x50xf32>
    %118 = arith.subf %112, %117 : vector<1x50xf32>
    %c0_56 = arith.constant 0 : index
    %c0_57 = arith.constant 0 : index
    %c0_58 = arith.constant 0 : index
    %119 = vector.load %arg15[%c0_56, %c0_57, %c0_58] : memref<1x1x50xf32, #tpu.memory_space<vmem>>, vector<1x1x50xf32>
    %120 = vector.shape_cast %119 : vector<1x1x50xf32> to vector<1x50xf32>
    %121 = vector.shape_cast %118 : vector<1x50xf32> to vector<1x1x50xf32>
    tpu.vector_store %arg15[%c0_56, %c0_57, %c0_58], %121 {strides = array<i32>} : memref<1x1x50xf32, #tpu.memory_space<vmem>>, vector<1x1x50xf32>,
    return
  }
  func.func @transform_0(%arg0: i32, %arg1: memref<1xi32, #tpu.memory_space<smem>>) -> (i32, i32, i32) {
    %0 = arith.index_cast %arg0 : i32 to index
    %1 = memref.load %arg1[%0] : memref<1xi32, #tpu.memory_space<smem>>
    %c0_i32 = arith.constant 0 : i32
    %c0_i32_0 = arith.constant 0 : i32
    %c0_i32_1 = arith.constant 0 : i32
    return %1, %c0_i32, %c0_i32_0 : i32, i32, i32
  }
  func.func @transform_1(%arg0: i32, %arg1: memref<1xi32, #tpu.memory_space<smem>>) -> (i32, i32) {
    %c0_i32 = arith.constant 0 : i32
    %c0_i32_0 = arith.constant 0 : i32
    %c0_i32_1 = arith.constant 0 : i32
    return %c0_i32, %c0_i32_0 : i32, i32
  }
  func.func @transform_2(%arg0: i32, %arg1: memref<1xi32, #tpu.memory_space<smem>>) -> (i32, i32) {
    %c0_i32 = arith.constant 0 : i32
    %c0_i32_0 = arith.constant 0 : i32
    %c0_i32_1 = arith.constant 0 : i32
    return %c0_i32, %c0_i32_0 : i32, i32
  }
  func.func @transform_3(%arg0: i32, %arg1: memref<1xi32, #tpu.memory_space<smem>>) -> (i32, i32) {
    %c0_i32 = arith.constant 0 : i32
    %c0_i32_0 = arith.constant 0 : i32
    %c0_i32_1 = arith.constant 0 : i32
    return %c0_i32, %c0_i32_0 : i32, i32
  }
  func.func @transform_4(%arg0: i32, %arg1: memref<1xi32, #tpu.memory_space<smem>>) -> (i32, i32) {
    %c0_i32 = arith.constant 0 : i32
    %c0_i32_0 = arith.constant 0 : i32
    %c0_i32_1 = arith.constant 0 : i32
    return %c0_i32, %c0_i32_0 : i32, i32
  }
  func.func @transform_5(%arg0: i32, %arg1: memref<1xi32, #tpu.memory_space<smem>>) -> (i32, i32) {
    %c0_i32 = arith.constant 0 : i32
    %c0_i32_0 = arith.constant 0 : i32
    %c0_i32_1 = arith.constant 0 : i32
    return %c0_i32, %c0_i32_0 : i32, i32
  }
  func.func @transform_6(%arg0: i32, %arg1: memref<1xi32, #tpu.memory_space<smem>>) -> (i32, i32) {
    %c0_i32 = arith.constant 0 : i32
    %c0_i32_0 = arith.constant 0 : i32
    %c0_i32_1 = arith.constant 0 : i32
    return %c0_i32, %c0_i32_0 : i32, i32
  }
  func.func @transform_7(%arg0: i32, %arg1: memref<1xi32, #tpu.memory_space<smem>>) -> (i32, i32) {
    %c0_i32 = arith.constant 0 : i32
    %c0_i32_0 = arith.constant 0 : i32
    %c0_i32_1 = arith.constant 0 : i32
    return %c0_i32, %c0_i32_0 : i32, i32
  }
  func.func @transform_8(%arg0: i32, %arg1: memref<1xi32, #tpu.memory_space<smem>>) -> (i32, i32) {
    %c0_i32 = arith.constant 0 : i32
    %c0_i32_0 = arith.constant 0 : i32
    %c0_i32_1 = arith.constant 0 : i32
    return %c0_i32, %c0_i32_0 : i32, i32
  }
  func.func @transform_9(%arg0: i32, %arg1: memref<1xi32, #tpu.memory_space<smem>>) -> (i32, i32) {
    %c0_i32 = arith.constant 0 : i32
    %c0_i32_0 = arith.constant 0 : i32
    %c0_i32_1 = arith.constant 0 : i32
    return %c0_i32, %c0_i32_0 : i32, i32
  }
  func.func @transform_10(%arg0: i32, %arg1: memref<1xi32, #tpu.memory_space<smem>>) -> (i32, i32) {
    %c0_i32 = arith.constant 0 : i32
    %c0_i32_0 = arith.constant 0 : i32
    %c0_i32_1 = arith.constant 0 : i32
    return %c0_i32, %c0_i32_0 : i32, i32
  }
  func.func @transform_11(%arg0: i32, %arg1: memref<1xi32, #tpu.memory_space<smem>>) -> (i32, i32) {
    %c0_i32 = arith.constant 0 : i32
    %c0_i32_0 = arith.constant 0 : i32
    %c0_i32_1 = arith.constant 0 : i32
    return %c0_i32, %c0_i32_0 : i32, i32
  }
  func.func @transform_12(%arg0: i32, %arg1: memref<1xi32, #tpu.memory_space<smem>>) -> (i32, i32) {
    %c0_i32 = arith.constant 0 : i32
    %c0_i32_0 = arith.constant 0 : i32
    %c0_i32_1 = arith.constant 0 : i32
    return %c0_i32, %c0_i32_0 : i32, i32
  }
  func.func @transform_13(%arg0: i32, %arg1: memref<1xi32, #tpu.memory_space<smem>>) -> (i32, i32, i32) {
    %c0_i32 = arith.constant 0 : i32
    %c0_i32_0 = arith.constant 0 : i32
    %c0_i32_1 = arith.constant 0 : i32
    return %arg0, %c0_i32, %c0_i32_0 : i32, i32, i32
  }
  func.func @transform_14(%arg0: i32, %arg1: memref<1xi32, #tpu.memory_space<smem>>) -> (i32, i32, i32) {
    %c0_i32 = arith.constant 0 : i32
    %c0_i32_0 = arith.constant 0 : i32
    %c0_i32_1 = arith.constant 0 : i32
    return %arg0, %c0_i32, %c0_i32_0 : i32, i32, i32
  }
  func.func @transform_15(%arg0: i32, %arg1: memref<1xi32, #tpu.memory_space<smem>>) -> (i32, i32) {
    %c0_i32 = arith.constant 0 : i32
    %c0_i32_0 = arith.constant 0 : i32
    %c0_i32_1 = arith.constant 0 : i32
    return %c0_i32, %c0_i32_0 : i32, i32
  }
}

</mosaic_0001>

<llo_original>
// kernel: tpu_custom_call.1
$region0: #{tpu_custom_call.1}
  #allocation0 [shape = 'u32[]', space=smem, size = 0x4, offset = 0x4, fixed_abs, tag = 'smem constant byte address 0x4 - core index']
  #allocation1 [shape = 'u32[144,128]{1,0:T(1,128)}', space=vmem, size = 0x12000, scoped, tag = 'internal scratch']
  #allocation2 [shape = 'f32[1,64]{1,0:T(1,128)}', space=vmem, size = 0x200, scoped, tag = 'scratch operand']
  #allocation3 [shape = 's32[1]{0}', space=sflag, size = 0x4, scoped, tag = 'scoped memory for tpu_custom_call.1']
  #allocation4 [shape = 's32[1]{0:T(128)S(6)}', space=smem, size = 0x200, scoped, tag = 'prefetched SMEM operand 0']
  %s0 = inlined_call_operand.<no memory space> [shape: s32[1], index: 0, kind: input, shape index: {}]
  %s1 = inlined_call_operand.vmem [shape: f32[50,1,32], index: 1, kind: input, shape index: {}]
  %s2 = inlined_call_operand.vmem [shape: f32[1,64], index: 2, kind: input, shape index: {}]
  %s3 = inlined_call_operand.vmem [shape: f32[8,64], index: 3, kind: input, shape index: {}]
  %s4 = inlined_call_operand.vmem [shape: f32[8,64], index: 4, kind: input, shape index: {}]
  %s5 = inlined_call_operand.vmem [shape: f32[32,192], index: 5, kind: input, shape index: {}]
  %s6 = inlined_call_operand.vmem [shape: f32[32,96], index: 6, kind: input, shape index: {}]
  %s7 = inlined_call_operand.vmem [shape: f32[32,96], index: 7, kind: input, shape index: {}]
  %s8 = inlined_call_operand.vmem [shape: f32[1,192], index: 8, kind: input, shape index: {}]
  %s9 = inlined_call_operand.vmem [shape: f32[1,192], index: 9, kind: input, shape index: {}]
  %s10 = inlined_call_operand.vmem [shape: f32[128,32], index: 10, kind: input, shape index: {}]
  %s11 = inlined_call_operand.vmem [shape: f32[1,32], index: 11, kind: input, shape index: {}]
  %s12 = inlined_call_operand.vmem [shape: f32[32,50], index: 12, kind: input, shape index: {}]
  %s13 = inlined_call_operand.vmem [shape: f32[1,50], index: 13, kind: input, shape index: {}]
  %s14 = inlined_call_operand.hbm [shape: f32[1,1,50], index: 14, kind: output, shape index: {0}]
  %s15 = inlined_call_operand.hbm [shape: f32[1,1,8], index: 15, kind: output, shape index: {1}]
  %s16 = inlined_call_operand.hbm [shape: f32[1,64], index: 16, kind: output, shape index: {2}]
  %17 = xla_tuple %s14, %s15, %s16
  %s18 = sld [smem:[#allocation0]]
  $region82: #{tpu_custom_call.1} parent=0
    _
  %s20 = ssub.s32 1, %s18
  %s21 = scalar_select 0, %s20, %s18
  %22 = sst [smem:[#allocation4]] %s0
  $region1: #{tpu_custom_call.1} parent=0
    #allocation5 [shape = 'u8[512]{0}', space=vmem, size = 0x400, scoped, tag = 'output window, operand 0, single buffered']
    #allocation6 [shape = 's32[1]{0}', space=sflag, size = 0x4, scoped, tag = 'scoped memory for tpu_custom_call.1']
    #allocation7 [shape = 'u8[512]{0}', space=vmem, size = 0x400, scoped, tag = 'output window, operand 1, single buffered']
    #allocation8 [shape = 's32[1]{0}', space=sflag, size = 0x4, scoped, tag = 'scoped memory for tpu_custom_call.1']
    #allocation9 [shape = 'u8[512]{0}', space=vmem, size = 0x400, scoped, tag = 'output window, operand 2, single buffered']
    %23 = vsyncpa [#allocation6], 0
    %24 = vsyncpa [#allocation8], 0
    // Predicated region
    $region2: #{tpu_custom_call.1} parent=1 // pred_check
      _
    $region3: #{tpu_custom_call.1} parent=1 // pred_check_branch
      %26 = sbr.rel (0) target = $region5
    $region4: #{tpu_custom_call.1} parent=1 // pred_region
      %s27 = sld [smem:[#allocation4]]
      %p28 = scmp.lt.s32.totalorder %s27, 49
      %s29 = scalar_select %p28, %s27, 49
      %s30 = scalar_lea.vmem %s1, %s29
      %s31 = sld [smem:[#allocation4]]
    $region5: #{tpu_custom_call.1} parent=1 // pred_fallthru
      _
    // Predicated region
    $region6: #{tpu_custom_call.1} parent=1 // pred_check
      _
    $region7: #{tpu_custom_call.1} parent=1 // pred_check_branch
      %33 = sbr.rel (0) target = $region9
    $region8: #{tpu_custom_call.1} parent=1 // pred_region
      _
    $region9: #{tpu_custom_call.1} parent=1 // pred_fallthru
      _
    // Predicated region
    $region10: #{tpu_custom_call.1} parent=1 // pred_check
      _
    $region11: #{tpu_custom_call.1} parent=1 // pred_check_branch
      %35 = sbr.rel (0) target = $region13
    $region12: #{tpu_custom_call.1} parent=1 // pred_region
      _
    $region13: #{tpu_custom_call.1} parent=1 // pred_fallthru
      _
    // Predicated region
    $region14: #{tpu_custom_call.1} parent=1 // pred_check
      _
    $region15: #{tpu_custom_call.1} parent=1 // pred_check_branch
      %37 = sbr.rel (0) target = $region17
    $region16: #{tpu_custom_call.1} parent=1 // pred_region
      _
    $region17: #{tpu_custom_call.1} parent=1 // pred_fallthru
      _
    // Predicated region
    $region18: #{tpu_custom_call.1} parent=1 // pred_check
      _
    $region19: #{tpu_custom_call.1} parent=1 // pred_check_branch
      %39 = sbr.rel (0) target = $region21
    $region20: #{tpu_custom_call.1} parent=1 // pred_region
      _
    $region21: #{tpu_custom_call.1} parent=1 // pred_fallthru
      _
    // Predicated region
    $region22: #{tpu_custom_call.1} parent=1 // pred_check
      _
    $region23: #{tpu_custom_call.1} parent=1 // pred_check_branch
      %41 = sbr.rel (0) target = $region25
    $region24: #{tpu_custom_call.1} parent=1 // pred_region
      _
    $region25: #{tpu_custom_call.1} parent=1 // pred_fallthru
      _
    // Predicated region
    $region26: #{tpu_custom_call.1} parent=1 // pred_check
      _
    $region27: #{tpu_custom_call.1} parent=1 // pred_check_branch
      %43 = sbr.rel (0) target = $region29
    $region28: #{tpu_custom_call.1} parent=1 // pred_region
      _
    $region29: #{tpu_custom_call.1} parent=1 // pred_fallthru
      _
    // Predicated region
    $region30: #{tpu_custom_call.1} parent=1 // pred_check
      _
    $region31: #{tpu_custom_call.1} parent=1 // pred_check_branch
      %45 = sbr.rel (0) target = $region33
    $region32: #{tpu_custom_call.1} parent=1 // pred_region
      _
    $region33: #{tpu_custom_call.1} parent=1 // pred_fallthru
      _
    // Predicated region
    $region34: #{tpu_custom_call.1} parent=1 // pred_check
      _
    $region35: #{tpu_custom_call.1} parent=1 // pred_check_branch
      %47 = sbr.rel (0) target = $region37
    $region36: #{tpu_custom_call.1} parent=1 // pred_region
      _
    $region37: #{tpu_custom_call.1} parent=1 // pred_fallthru
      _
    // Predicated region
    $region38: #{tpu_custom_call.1} parent=1 // pred_check
      _
    $region39: #{tpu_custom_call.1} parent=1 // pred_check_branch
      %49 = sbr.rel (0) target = $region41
    $region40: #{tpu_custom_call.1} parent=1 // pred_region
      _
    $region41: #{tpu_custom_call.1} parent=1 // pred_fallthru
      _
    // Predicated region
    $region42: #{tpu_custom_call.1} parent=1 // pred_check
      _
    $region43: #{tpu_custom_call.1} parent=1 // pred_check_branch
      %51 = sbr.rel (0) target = $region45
    $region44: #{tpu_custom_call.1} parent=1 // pred_region
      _
    $region45: #{tpu_custom_call.1} parent=1 // pred_fallthru
      _
    // Predicated region
    $region46: #{tpu_custom_call.1} parent=1 // pred_check
      _
    $region47: #{tpu_custom_call.1} parent=1 // pred_check_branch
      %53 = sbr.rel (0) target = $region49
    $region48: #{tpu_custom_call.1} parent=1 // pred_region
      _
    $region49: #{tpu_custom_call.1} parent=1 // pred_fallthru
      _
    // Predicated region
    $region50: #{tpu_custom_call.1} parent=1 // pred_check
      _
    $region51: #{tpu_custom_call.1} parent=1 // pred_check_branch
      %55 = sbr.rel (0) target = $region53
    $region52: #{tpu_custom_call.1} parent=1 // pred_region
      _
    $region53: #{tpu_custom_call.1} parent=1 // pred_fallthru
      _
    %s56 = sld [smem:[#allocation4]]
    %p57 = scmp.lt.s32.totalorder %s56, 49
    %s58 = scalar_select %p57, %s56, 49
    %s59 = scalar_lea.vmem %s1, %s58
    %s60 = sld [smem:[#allocation4]]
    %p61 = scmp.lt.s32.totalorder %s60, 49
    %s62 = scalar_select %p61, %s60, 49
    %s63 = scalar_lea.vmem %s1, %s62
    %s64 = sld [smem:[#allocation4]]
    %p65 = scmp.eq.s32.totalorder 0, 0
    // Predicated region
    $region54: #{tpu_custom_call.1} parent=1 // pred_check
      %p66 = pneg %p65
    $region55: #{tpu_custom_call.1} parent=1 // pred_check_branch
      %68 = sbr.rel (%p66) target = $region57
    $region56: #{tpu_custom_call.1} parent=1 // pred_region
      %v69 = vld [vmem:[%s2] sm:$0x1]
      %vm70 = vcmask 516096
      %71 = vst.msk [vmem:[#allocation2] sm:$0x1] %vm70, %v69
    $region57: #{tpu_custom_call.1} parent=1 // pred_fallthru
      _
    %v72 = vld [vmem:[%s63] sm:$0x1]
    %v73 = vmax.f32 %v72, 0.0
    %v74 = vld [vmem:[#allocation2] sm:$0x1]
    %v75 = vld [vmem:[%s5] sm:$0xff]
    %v76 = vld [vmem:[%s5 + $0x8] sm:$0xff]
    %v77 = vld [vmem:[%s5 + $0x10] sm:$0xff]
    %v78 = vld [vmem:[%s5 + $0x18] sm:$0xff]
    %v79 = vld [vmem:[%s5 + $0x20] sm:$0xff]
    %v80 = vld [vmem:[%s5 + $0x28] sm:$0xff]
    %v81 = vld [vmem:[%s5 + $0x30] sm:$0xff]
    %v82 = vld [vmem:[%s5 + $0x38] sm:$0xff]
    %v83 = vld [vmem:[%s8] sm:$0x3]
    %v85 = vlaneseq
    %v86 = vshrl.u32 %v85, 7
    %v87 = vsub.s32 0, %v86
    %v88 = vrot.slane %v83, %v87
    %v89 = vlaneseq
    %v90 = vshrl.u32 %v89, 7
    %v91 = vsub.s32 1, %v90
    %v92 = vrot.slane %v83, %v91
    %vm95 = vcmask 261120
    %v97 = vsel %vm95, %v73, 0
    %99 = vmatprep.subr.mxu0 0.0
    %100 = vmatpush1.msra.mxu0 0.0
    %101 = vmatprep.subr.mxu0 0.0
    %102 = vmatpush1.msra.mxu0 0.0
    %103 = vmatprep.subr.mxu0 0.0
    %104 = vmatpush1.msra.mxu0 0.0
    %105 = vmatprep.subr.mxu0 0.0
    %106 = vmatpush1.msra.mxu0 0.0
    %107 = vmatprep.subr.mxu0 0.0
    %108 = vmatpush1.msra.mxu0 0.0
    %109 = vmatprep.subr.mxu0 0.0
    %110 = vmatpush1.msra.mxu0 0.0
    %111 = vmatprep.subr.mxu0 0.0
    %112 = vmatpush1.msra.mxu0 0.0
    %113 = vmatprep.subr.mxu0 0.0
    %114 = vmatpush1.msra.mxu0 0.0
    %115 = vmatprep.subr.mxu0 0.0
    %116 = vmatpush1.msra.mxu0 0.0
    %117 = vmatprep.subr.mxu0 0.0
    %118 = vmatpush1.msra.mxu0 0.0
    %119 = vmatprep.subr.mxu0 0.0
    %120 = vmatpush1.msra.mxu0 0.0
    %121 = vmatprep.subr.mxu0 0.0
    %122 = vmatpush1.msra.mxu0 0.0
    %123 = vmatprep.subr.mxu0 %v82
    %124 = vmatpush1.msra.mxu0 %v81
    %125 = vmatprep.subr.mxu0 %v80
    %126 = vmatpush1.msra.mxu0 %v79
    %127 = vmatprep.subr.mxu0 %v78
    %128 = vmatpush1.msra.mxu0 %v77
    %129 = vmatprep.subr.mxu0 %v76
    %130 = vmatpush1.msra.mxu0 %v75
    %131 = vmatprep.subr.mxu0 0.0
    %132 = vmatpush2.msra.mxu0 0.0
    %133 = vmatprep.subr.mxu0 0.0
    %134 = vmatpush2.msra.mxu0 0.0
    %135 = vmatprep.subr.mxu0 0.0
    %136 = vmatpush2.msra.mxu0 0.0
    %137 = vmatprep.subr.mxu0 0.0
    %138 = vmatpush2.msra.mxu0 0.0
    %139 = vmatprep.subr.mxu0 0.0
    %140 = vmatpush2.msra.mxu0 0.0
    %141 = vmatprep.subr.mxu0 0.0
    %142 = vmatpush2.msra.mxu0 0.0
    %143 = vmatprep.subr.mxu0 0.0
    %144 = vmatpush2.msra.mxu0 0.0
    %145 = vmatprep.subr.mxu0 0.0
    %146 = vmatpush2.msra.mxu0 0.0
    %147 = vmatprep.subr.mxu0 0.0
    %148 = vmatpush2.msra.mxu0 0.0
    %149 = vmatprep.subr.mxu0 0.0
    %150 = vmatpush2.msra.mxu0 0.0
    %151 = vmatprep.subr.mxu0 0.0
    %152 = vmatpush2.msra.mxu0 0.0
    %153 = vmatprep.subr.mxu0 0.0
    %154 = vmatpush2.msra.mxu0 0.0
    %155 = vmatprep.subr.mxu0 0.0
    %156 = vmatpush2.msra.mxu0 0.0
    %157 = vmatprep.subr.mxu0 0.0
    %158 = vmatpush2.msra.mxu0 0.0
    %159 = vmatprep.subr.mxu0 0.0
    %160 = vmatpush2.msra.mxu0 0.0
    %161 = vmatprep.subr.mxu0 0.0
    %162 = vmatpush2.msra.mxu0 0.0
    %163 = vmatprep.mubr.f32.mxu0 0.0
    %164 = vmatmul.mubr.f32.gmra.mxu0 %v97
    %v165 = vpop.f32.mrf.mxu0
    %v166 = vadd.f32 %v88, %v165
    %v167 = vpop.f32.mrf.mxu0
    %v168 = vadd.f32 %v92, %v167
    %169 = vdwg.mxu0
    %v170 = vld [vmem:[%s6] sm:$0xff]
    %v171 = vld [vmem:[%s6 + $0x8] sm:$0xff]
    %v172 = vld [vmem:[%s6 + $0x10] sm:$0xff]
    %v173 = vld [vmem:[%s6 + $0x18] sm:$0xff]
    %v174 = vld [vmem:[%s9] sm:$0x1]
    %v176 = vsel %vm95, %v74, 0
    %178 = vmatprep.subr.mxu0 0.0
    %179 = vmatpush1.msra.mxu0 0.0
    %180 = vmatprep.subr.mxu0 0.0
    %181 = vmatpush1.msra.mxu0 0.0
    %182 = vmatprep.subr.mxu0 0.0
    %183 = vmatpush1.msra.mxu0 0.0
    %184 = vmatprep.subr.mxu0 0.0
    %185 = vmatpush1.msra.mxu0 0.0
    %186 = vmatprep.subr.mxu0 0.0
    %187 = vmatpush1.msra.mxu0 0.0
    %188 = vmatprep.subr.mxu0 0.0
    %189 = vmatpush1.msra.mxu0 0.0
    %190 = vmatprep.subr.mxu0 0.0
    %191 = vmatpush1.msra.mxu0 0.0
    %192 = vmatprep.subr.mxu0 0.0
    %193 = vmatpush1.msra.mxu0 0.0
    %194 = vmatprep.subr.mxu0 0.0
    %195 = vmatpush1.msra.mxu0 0.0
    %196 = vmatprep.subr.mxu0 0.0
    %197 = vmatpush1.msra.mxu0 0.0
    %198 = vmatprep.subr.mxu0 0.0
    %199 = vmatpush1.msra.mxu0 0.0
    %200 = vmatprep.subr.mxu0 0.0
    %201 = vmatpush1.msra.mxu0 0.0
    %202 = vmatprep.subr.mxu0 0.0
    %203 = vmatpush1.msra.mxu0 %v173
    %204 = vmatprep.subr.mxu0 0.0
    %205 = vmatpush1.msra.mxu0 %v172
    %206 = vmatprep.subr.mxu0 0.0
    %207 = vmatpush1.msra.mxu0 %v171
    %208 = vmatprep.subr.mxu0 0.0
    %209 = vmatpush1.msra.mxu0 %v170
    %210 = vmatprep.subr.mxu0 0.0
    %211 = vmatpush2.msra.mxu0 0.0
    %212 = vmatprep.subr.mxu0 0.0
    %213 = vmatpush2.msra.mxu0 0.0
    %214 = vmatprep.subr.mxu0 0.0
    %215 = vmatpush2.msra.mxu0 0.0
    %216 = vmatprep.subr.mxu0 0.0
    %217 = vmatpush2.msra.mxu0 0.0
    %218 = vmatprep.subr.mxu0 0.0
    %219 = vmatpush2.msra.mxu0 0.0
    %220 = vmatprep.subr.mxu0 0.0
    %221 = vmatpush2.msra.mxu0 0.0
    %222 = vmatprep.subr.mxu0 0.0
    %223 = vmatpush2.msra.mxu0 0.0
    %224 = vmatprep.subr.mxu0 0.0
    %225 = vmatpush2.msra.mxu0 0.0
    %226 = vmatprep.subr.mxu0 0.0
    %227 = vmatpush2.msra.mxu0 0.0
    %228 = vmatprep.subr.mxu0 0.0
    %229 = vmatpush2.msra.mxu0 0.0
    %230 = vmatprep.subr.mxu0 0.0
    %231 = vmatpush2.msra.mxu0 0.0
    %232 = vmatprep.subr.mxu0 0.0
    %233 = vmatpush2.msra.mxu0 0.0
    %234 = vmatprep.subr.mxu0 0.0
    %235 = vmatpush2.msra.mxu0 0.0
    %236 = vmatprep.subr.mxu0 0.0
    %237 = vmatpush2.msra.mxu0 0.0
    %238 = vmatprep.subr.mxu0 0.0
    %239 = vmatpush2.msra.mxu0 0.0
    %240 = vmatprep.subr.mxu0 0.0
    %241 = vmatpush2.msra.mxu0 0.0
    %242 = vmatprep.mubr.f32.mxu0 0.0
    %243 = vmatmul.mubr.f32.gmra.mxu0 %v176
    %v244 = vpop.f32.mrf.mxu0
    %v245 = vadd.f32 %v174, %v244
    %v246 = vpop.f32.mrf.mxu0
    %247 = vdwg.mxu0
    %v248 = vld [vmem:[%s7] sm:$0xff]
    %v249 = vld [vmem:[%s7 + $0x8] sm:$0xff]
    %v250 = vld [vmem:[%s7 + $0x10] sm:$0xff]
    %v251 = vld [vmem:[%s7 + $0x18] sm:$0xff]
    %v252 = vld [vmem:[%s9] sm:$0x3]
    %v253 = vlaneseq
    %v254 = vshrl.u32 %v253, 7
    %v255 = vsub.s32 0, %v254
    %v256 = vrot.slane %v74, %v255
    %257 = vrot.lane.b32.xlu0 %v256, 96
    %v258 = vpop.permute.xlu0 %257
    %v260 = vlaneseq
    %v261 = vshrl.u32 %v260, 7
    %v262 = vsub.s32 0, %v261
    %v263 = vrot.slane %v252, %v262
    %v264 = vlaneseq
    %v265 = vshrl.u32 %v264, 7
    %v266 = vsub.s32 1, %v265
    %v267 = vrot.slane %v252, %v266
    %268 = vrot.lane.b32.xlu0 %v263, 32
    %v269 = vpop.permute.xlu0 %268
    %270 = vrot.lane.b32.xlu0 %v267, 32
    %v271 = vpop.permute.xlu0 %270
    %v272 = vsel %vm95, %v269, %v271
    %v274 = vsel %vm95, %v258, 0
    %276 = vmatprep.subr.mxu0 0.0
    %277 = vmatpush1.msra.mxu0 0.0
    %278 = vmatprep.subr.mxu0 0.0
    %279 = vmatpush1.msra.mxu0 0.0
    %280 = vmatprep.subr.mxu0 0.0
    %281 = vmatpush1.msra.mxu0 0.0
    %282 = vmatprep.subr.mxu0 0.0
    %283 = vmatpush1.msra.mxu0 0.0
    %284 = vmatprep.subr.mxu0 0.0
    %285 = vmatpush1.msra.mxu0 0.0
    %286 = vmatprep.subr.mxu0 0.0
    %287 = vmatpush1.msra.mxu0 0.0
    %288 = vmatprep.subr.mxu0 0.0
    %289 = vmatpush1.msra.mxu0 0.0
    %290 = vmatprep.subr.mxu0 0.0
    %291 = vmatpush1.msra.mxu0 0.0
    %292 = vmatprep.subr.mxu0 0.0
    %293 = vmatpush1.msra.mxu0 0.0
    %294 = vmatprep.subr.mxu0 0.0
    %295 = vmatpush1.msra.mxu0 0.0
    %296 = vmatprep.subr.mxu0 0.0
    %297 = vmatpush1.msra.mxu0 0.0
    %298 = vmatprep.subr.mxu0 0.0
    %299 = vmatpush1.msra.mxu0 0.0
    %300 = vmatprep.subr.mxu0 0.0
    %301 = vmatpush1.msra.mxu0 %v251
    %302 = vmatprep.subr.mxu0 0.0
    %303 = vmatpush1.msra.mxu0 %v250
    %304 = vmatprep.subr.mxu0 0.0
    %305 = vmatpush1.msra.mxu0 %v249
    %306 = vmatprep.subr.mxu0 0.0
    %307 = vmatpush1.msra.mxu0 %v248
    %308 = vmatprep.subr.mxu0 0.0
    %309 = vmatpush2.msra.mxu0 0.0
    %310 = vmatprep.subr.mxu0 0.0
    %311 = vmatpush2.msra.mxu0 0.0
    %312 = vmatprep.subr.mxu0 0.0
    %313 = vmatpush2.msra.mxu0 0.0
    %314 = vmatprep.subr.mxu0 0.0
    %315 = vmatpush2.msra.mxu0 0.0
    %316 = vmatprep.subr.mxu0 0.0
    %317 = vmatpush2.msra.mxu0 0.0
    %318 = vmatprep.subr.mxu0 0.0
    %319 = vmatpush2.msra.mxu0 0.0
    %320 = vmatprep.subr.mxu0 0.0
    %321 = vmatpush2.msra.mxu0 0.0
    %322 = vmatprep.subr.mxu0 0.0
    %323 = vmatpush2.msra.mxu0 0.0
    %324 = vmatprep.subr.mxu0 0.0
    %325 = vmatpush2.msra.mxu0 0.0
    %326 = vmatprep.subr.mxu0 0.0
    %327 = vmatpush2.msra.mxu0 0.0
    %328 = vmatprep.subr.mxu0 0.0
    %329 = vmatpush2.msra.mxu0 0.0
    %330 = vmatprep.subr.mxu0 0.0
    %331 = vmatpush2.msra.mxu0 0.0
    %332 = vmatprep.subr.mxu0 0.0
    %333 = vmatpush2.msra.mxu0 0.0
    %334 = vmatprep.subr.mxu0 0.0
    %335 = vmatpush2.msra.mxu0 0.0
    %336 = vmatprep.subr.mxu0 0.0
    %337 = vmatpush2.msra.mxu0 0.0
    %338 = vmatprep.subr.mxu0 0.0
    %339 = vmatpush2.msra.mxu0 0.0
    %340 = vmatprep.mubr.f32.mxu0 0.0
    %341 = vmatmul.mubr.f32.gmra.mxu0 %v274
    %v342 = vpop.f32.mrf.mxu0
    %v343 = vadd.f32 %v272, %v342
    %v344 = vpop.f32.mrf.mxu0
    %345 = vdwg.mxu0
    %v346 = vadd.f32 %v166, %v245
    %v347 = vxor.u32 %v346, 2147483648
    %v348 = vmul.f32 %v347, 1.442695
    %v349 = vpow.pop %v348
    %v350 = vadd.f32 %v349, 1.0
    %v351 = vrcp.pop %v350
    %v352 = vmul.f32 1.0, %v351
    %354 = vrot.lane.b32.xlu0 %v245, 64
    %v355 = vpop.permute.xlu0 %354
    %v357 = vmul.f32 %v352, %v355
    %359 = vrot.lane.b32.xlu0 %v357, 64
    %v360 = vpop.permute.xlu0 %359
    %v362 = vadd.f32 %v166, %v360
    %v363 = vtanh.pop %v362
    %v364 = vsub.f32 1.0, %v352
    %366 = vrot.lane.b32.xlu0 %v363, 96
    %v367 = vpop.permute.xlu0 %366
    %v369 = vmul.f32 %v364, %v367
    %370 = vrot.lane.b32.xlu0 %v256, 32
    %v371 = vpop.permute.xlu0 %370
    %v373 = vmul.f32 %v352, %v371
    %v374 = vadd.f32 %v369, %v373
    %376 = vrot.lane.b32.xlu0 %v343, 96
    %v377 = vpop.permute.xlu0 %376
    %v379 = vadd.f32 %v166, %v377
    %v380 = vxor.u32 %v379, 2147483648
    %v381 = vmul.f32 %v380, 1.442695
    %v382 = vpow.pop %v381
    %v383 = vadd.f32 %v382, 1.0
    %v384 = vrcp.pop %v383
    %v385 = vmul.f32 1.0, %v384
    %v386 = vadd.f32 %v168, %v377
    %v387 = vxor.u32 %v386, 2147483648
    %v388 = vmul.f32 %v387, 1.442695
    %v389 = vpow.pop %v388
    %v390 = vadd.f32 %v389, 1.0
    %v391 = vrcp.pop %v390
    %v392 = vmul.f32 1.0, %v391
    %393 = vrot.lane.b32.xlu0 %v343, 32
    %v394 = vpop.permute.xlu0 %393
    %v396 = vmul.f32 %v385, %v394
    %398 = vrot.lane.b32.xlu0 %v396, 64
    %v399 = vpop.permute.xlu0 %398
    %v401 = vadd.f32 %v168, %v399
    %v402 = vtanh.pop %v401
    %v403 = vsub.f32 1.0, %v392
    %405 = vrot.lane.b32.xlu0 %v402, 96
    %v406 = vpop.permute.xlu0 %405
    %v408 = vmul.f32 %v403, %v406
    %v410 = vmul.f32 %v392, %v258
    %v411 = vadd.f32 %v408, %v410
    %413 = vrot.lane.b32.xlu0 %v374, 96
    %v414 = vpop.permute.xlu0 %413
    %vm416 = vcmask 253952
    %417 = vst.msk [vmem:[#allocation2] sm:$0x1] %vm416, %v414
    %419 = vrot.lane.b32.xlu0 %v411, 32
    %v420 = vpop.permute.xlu0 %419
    %vm422 = vcmask 516352
    %423 = vst.msk [vmem:[#allocation2] sm:$0x1] %vm422, %v420
    %v424 = vld [vmem:[#allocation2] sm:$0x1]
    %vm425 = vcmask 516096
    %426 = vst.msk [vmem:[#allocation9] sm:$0x1] %vm425, %v424
    %v427 = vld [vmem:[%s4] sm:$0xff]
    %vm428 = vcmask 523264
    %v430 = vsel %vm428, %v424, 0
    %v433 = vsel %vm428, %v427, 0
    %435 = vmatprep.subr.mxu0 0.0
    %436 = vmatpush1.xpose.msra.mxu0 0.0
    %437 = vmatprep.subr.mxu0 0.0
    %438 = vmatpush1.xpose.msra.mxu0 0.0
    %439 = vmatprep.subr.mxu0 0.0
    %440 = vmatpush1.xpose.msra.mxu0 0.0
    %441 = vmatprep.subr.mxu0 0.0
    %442 = vmatpush1.xpose.msra.mxu0 0.0
    %443 = vmatprep.subr.mxu0 0.0
    %444 = vmatpush1.xpose.msra.mxu0 0.0
    %445 = vmatprep.subr.mxu0 0.0
    %446 = vmatpush1.xpose.msra.mxu0 0.0
    %447 = vmatprep.subr.mxu0 0.0
    %448 = vmatpush1.xpose.msra.mxu0 0.0
    %449 = vmatprep.subr.mxu0 0.0
    %450 = vmatpush1.xpose.msra.mxu0 0.0
    %451 = vmatprep.subr.mxu0 0.0
    %452 = vmatpush1.xpose.msra.mxu0 0.0
    %453 = vmatprep.subr.mxu0 0.0
    %454 = vmatpush1.xpose.msra.mxu0 0.0
    %455 = vmatprep.subr.mxu0 0.0
    %456 = vmatpush1.xpose.msra.mxu0 0.0
    %457 = vmatprep.subr.mxu0 0.0
    %458 = vmatpush1.xpose.msra.mxu0 0.0
    %459 = vmatprep.subr.mxu0 0.0
    %460 = vmatpush1.xpose.msra.mxu0 0.0
    %461 = vmatprep.subr.mxu0 0.0
    %462 = vmatpush1.xpose.msra.mxu0 0.0
    %463 = vmatprep.subr.mxu0 0.0
    %464 = vmatpush1.xpose.msra.mxu0 0.0
    %465 = vmatprep.subr.mxu0 0.0
    %466 = vmatpush1.xpose.msra.mxu0 %v433
    %467 = vmatprep.subr.mxu0 0.0
    %468 = vmatpush2.xpose.msra.mxu0 0.0
    %469 = vmatprep.subr.mxu0 0.0
    %470 = vmatpush2.xpose.msra.mxu0 0.0
    %471 = vmatprep.subr.mxu0 0.0
    %472 = vmatpush2.xpose.msra.mxu0 0.0
    %473 = vmatprep.subr.mxu0 0.0
    %474 = vmatpush2.xpose.msra.mxu0 0.0
    %475 = vmatprep.subr.mxu0 0.0
    %476 = vmatpush2.xpose.msra.mxu0 0.0
    %477 = vmatprep.subr.mxu0 0.0
    %478 = vmatpush2.xpose.msra.mxu0 0.0
    %479 = vmatprep.subr.mxu0 0.0
    %480 = vmatpush2.xpose.msra.mxu0 0.0
    %481 = vmatprep.subr.mxu0 0.0
    %482 = vmatpush2.xpose.msra.mxu0 0.0
    %483 = vmatprep.subr.mxu0 0.0
    %484 = vmatpush2.xpose.msra.mxu0 0.0
    %485 = vmatprep.subr.mxu0 0.0
    %486 = vmatpush2.xpose.msra.mxu0 0.0
    %487 = vmatprep.subr.mxu0 0.0
    %488 = vmatpush2.xpose.msra.mxu0 0.0
    %489 = vmatprep.subr.mxu0 0.0
    %490 = vmatpush2.xpose.msra.mxu0 0.0
    %491 = vmatprep.subr.mxu0 0.0
    %492 = vmatpush2.xpose.msra.mxu0 0.0
    %493 = vmatprep.subr.mxu0 0.0
    %494 = vmatpush2.xpose.msra.mxu0 0.0
    %495 = vmatprep.subr.mxu0 0.0
    %496 = vmatpush2.xpose.msra.mxu0 0.0
    %497 = vmatprep.subr.mxu0 0.0
    %498 = vmatpush2.xpose.msra.mxu0 0.0
    %499 = vmatprep.mubr.f32.mxu0 0.0
    %500 = vmatmul.mubr.f32.gmra.mxu0 %v430
    %v501 = vpop.f32.mrf.mxu0
    %v502 = vadd.f32 0.0, %v501
    %v503 = vpop.f32.mrf.mxu0
    %504 = vdwg.mxu0
    %vm505 = vcmask 57344
    %v506 = vsel %vm505, %v502, -inf
    %507 = vmax.xlane.f32.xlu0 %v506
    %v508 = vpop.xlane.xlu0 %507
    %v509 = vsub.f32 %v502, %v508
    %v510 = vmul.f32 %v509, 1.442695
    %v511 = vpow.pop %v510
    %v512 = vsel %vm505, %v511, 0.0
    %513 = vadd.xlane.f32.xlu0 %v512
    %v514 = vpop.xlane.xlu0 %513
    %v515 = vrcp.pop %v514
    %v516 = vmul.f32 %v511, %v515
    %517 = vst.msk [vmem:[#allocation7] sm:$0x1] %vm505, %v516
    %v518 = vld [vmem:[%s3] sm:$0xff]
    %vm519 = vcmask 64512
    %v521 = vsel %vm519, %v516, 0
    %523 = vmatprep.subr.mxu0 0.0
    %524 = vmatpush1.msra.mxu0 0.0
    %525 = vmatprep.subr.mxu0 0.0
    %526 = vmatpush1.msra.mxu0 0.0
    %527 = vmatprep.subr.mxu0 0.0
    %528 = vmatpush1.msra.mxu0 0.0
    %529 = vmatprep.subr.mxu0 0.0
    %530 = vmatpush1.msra.mxu0 0.0
    %531 = vmatprep.subr.mxu0 0.0
    %532 = vmatpush1.msra.mxu0 0.0
    %533 = vmatprep.subr.mxu0 0.0
    %534 = vmatpush1.msra.mxu0 0.0
    %535 = vmatprep.subr.mxu0 0.0
    %536 = vmatpush1.msra.mxu0 0.0
    %537 = vmatprep.subr.mxu0 0.0
    %538 = vmatpush1.msra.mxu0 0.0
    %539 = vmatprep.subr.mxu0 0.0
    %540 = vmatpush1.msra.mxu0 0.0
    %541 = vmatprep.subr.mxu0 0.0
    %542 = vmatpush1.msra.mxu0 0.0
    %543 = vmatprep.subr.mxu0 0.0
    %544 = vmatpush1.msra.mxu0 0.0
    %545 = vmatprep.subr.mxu0 0.0
    %546 = vmatpush1.msra.mxu0 0.0
    %547 = vmatprep.subr.mxu0 0.0
    %548 = vmatpush1.msra.mxu0 0.0
    %549 = vmatprep.subr.mxu0 0.0
    %550 = vmatpush1.msra.mxu0 0.0
    %551 = vmatprep.subr.mxu0 0.0
    %552 = vmatpush1.msra.mxu0 0.0
    %553 = vmatprep.subr.mxu0 0.0
    %554 = vmatpush1.msra.mxu0 %v518
    %555 = vmatprep.subr.mxu0 0.0
    %556 = vmatpush2.msra.mxu0 0.0
    %557 = vmatprep.subr.mxu0 0.0
    %558 = vmatpush2.msra.mxu0 0.0
    %559 = vmatprep.subr.mxu0 0.0
    %560 = vmatpush2.msra.mxu0 0.0
    %561 = vmatprep.subr.mxu0 0.0
    %562 = vmatpush2.msra.mxu0 0.0
    %563 = vmatprep.subr.mxu0 0.0
    %564 = vmatpush2.msra.mxu0 0.0
    %565 = vmatprep.subr.mxu0 0.0
    %566 = vmatpush2.msra.mxu0 0.0
    %567 = vmatprep.subr.mxu0 0.0
    %568 = vmatpush2.msra.mxu0 0.0
    %569 = vmatprep.subr.mxu0 0.0
    %570 = vmatpush2.msra.mxu0 0.0
    %571 = vmatprep.subr.mxu0 0.0
    %572 = vmatpush2.msra.mxu0 0.0
    %573 = vmatprep.subr.mxu0 0.0
    %574 = vmatpush2.msra.mxu0 0.0
    %575 = vmatprep.subr.mxu0 0.0
    %576 = vmatpush2.msra.mxu0 0.0
    %577 = vmatprep.subr.mxu0 0.0
    %578 = vmatpush2.msra.mxu0 0.0
    %579 = vmatprep.subr.mxu0 0.0
    %580 = vmatpush2.msra.mxu0 0.0
    %581 = vmatprep.subr.mxu0 0.0
    %582 = vmatpush2.msra.mxu0 0.0
    %583 = vmatprep.subr.mxu0 0.0
    %584 = vmatpush2.msra.mxu0 0.0
    %585 = vmatprep.subr.mxu0 0.0
    %586 = vmatpush2.msra.mxu0 0.0
    %587 = vmatprep.mubr.f32.mxu0 0.0
    %588 = vmatmul.mubr.f32.gmra.mxu0 %v521
    %v589 = vpop.f32.mrf.mxu0
    %v590 = vadd.f32 0.0, %v589
    %v591 = vpop.f32.mrf.mxu0
    %592 = vdwg.mxu0
    %v593 = vld [vmem:[%s10] sm:$0xff]
    %v594 = vld [vmem:[%s10 + $0x8] sm:$0xff]
    %v595 = vld [vmem:[%s10 + $0x10] sm:$0xff]
    %v596 = vld [vmem:[%s10 + $0x18] sm:$0xff]
    %v597 = vld [vmem:[%s10 + $0x20] sm:$0xff]
    %v598 = vld [vmem:[%s10 + $0x28] sm:$0xff]
    %v599 = vld [vmem:[%s10 + $0x30] sm:$0xff]
    %v600 = vld [vmem:[%s10 + $0x38] sm:$0xff]
    %v601 = vld [vmem:[%s10 + $0x40] sm:$0xff]
    %v602 = vld [vmem:[%s10 + $0x48] sm:$0xff]
    %v603 = vld [vmem:[%s10 + $0x50] sm:$0xff]
    %v604 = vld [vmem:[%s10 + $0x58] sm:$0xff]
    %v605 = vld [vmem:[%s10 + $0x60] sm:$0xff]
    %v606 = vld [vmem:[%s10 + $0x68] sm:$0xff]
    %v607 = vld [vmem:[%s10 + $0x70] sm:$0xff]
    %v608 = vld [vmem:[%s10 + $0x78] sm:$0xff]
    %609 = vmatprep.subr.mxu0 0.0
    %610 = vmatpush1.msra.mxu0 0.0
    %611 = vmatprep.subr.mxu0 0.0
    %612 = vmatpush1.msra.mxu0 0.0
    %613 = vmatprep.subr.mxu0 0.0
    %614 = vmatpush1.msra.mxu0 0.0
    %615 = vmatprep.subr.mxu0 0.0
    %616 = vmatpush1.msra.mxu0 0.0
    %617 = vmatprep.subr.mxu0 0.0
    %618 = vmatpush1.msra.mxu0 0.0
    %619 = vmatprep.subr.mxu0 0.0
    %620 = vmatpush1.msra.mxu0 0.0
    %621 = vmatprep.subr.mxu0 0.0
    %622 = vmatpush1.msra.mxu0 0.0
    %623 = vmatprep.subr.mxu0 0.0
    %624 = vmatpush1.msra.mxu0 0.0
    %625 = vmatprep.subr.mxu0 0.0
    %626 = vmatpush1.msra.mxu0 %v608
    %627 = vmatprep.subr.mxu0 0.0
    %628 = vmatpush1.msra.mxu0 %v607
    %629 = vmatprep.subr.mxu0 0.0
    %630 = vmatpush1.msra.mxu0 %v606
    %631 = vmatprep.subr.mxu0 0.0
    %632 = vmatpush1.msra.mxu0 %v605
    %633 = vmatprep.subr.mxu0 0.0
    %634 = vmatpush1.msra.mxu0 %v604
    %635 = vmatprep.subr.mxu0 0.0
    %636 = vmatpush1.msra.mxu0 %v603
    %637 = vmatprep.subr.mxu0 0.0
    %638 = vmatpush1.msra.mxu0 %v602
    %639 = vmatprep.subr.mxu0 0.0
    %640 = vmatpush1.msra.mxu0 %v601
    %641 = vmatprep.subr.mxu0 0.0
    %642 = vmatpush2.msra.mxu0 0.0
    %643 = vmatprep.subr.mxu0 0.0
    %644 = vmatpush2.msra.mxu0 0.0
    %645 = vmatprep.subr.mxu0 0.0
    %646 = vmatpush2.msra.mxu0 0.0
    %647 = vmatprep.subr.mxu0 0.0
    %648 = vmatpush2.msra.mxu0 0.0
    %649 = vmatprep.subr.mxu0 0.0
    %650 = vmatpush2.msra.mxu0 0.0
    %651 = vmatprep.subr.mxu0 0.0
    %652 = vmatpush2.msra.mxu0 0.0
    %653 = vmatprep.subr.mxu0 0.0
    %654 = vmatpush2.msra.mxu0 0.0
    %655 = vmatprep.subr.mxu0 0.0
    %656 = vmatpush2.msra.mxu0 0.0
    %657 = vmatprep.subr.mxu0 0.0
    %658 = vmatpush2.msra.mxu0 0.0
    %659 = vmatprep.subr.mxu0 0.0
    %660 = vmatpush2.msra.mxu0 0.0
    %661 = vmatprep.subr.mxu0 0.0
    %662 = vmatpush2.msra.mxu0 0.0
    %663 = vmatprep.subr.mxu0 0.0
    %664 = vmatpush2.msra.mxu0 0.0
    %665 = vmatprep.subr.mxu0 0.0
    %666 = vmatpush2.msra.mxu0 0.0
    %667 = vmatprep.subr.mxu0 0.0
    %668 = vmatpush2.msra.mxu0 0.0
    %669 = vmatprep.subr.mxu0 0.0
    %670 = vmatpush2.msra.mxu0 0.0
    %671 = vmatprep.subr.mxu0 0.0
    %672 = vmatpush2.msra.mxu0 0.0
    %673 = vmatprep.mubr.f32.mxu0 0.0
    %674 = vmatmul.mubr.f32.gmra.mxu0 %v430
    %v675 = vpop.f32.mrf.mxu0
    %v676 = vadd.f32 0.0, %v675
    %v677 = vpop.f32.mrf.mxu0
    %678 = vdwg.mxu0
    %v680 = vsel %vm428, %v590, 0
    %682 = vmatprep.subr.mxu0 0.0
    %683 = vmatpush1.msra.mxu0 0.0
    %684 = vmatprep.subr.mxu0 0.0
    %685 = vmatpush1.msra.mxu0 0.0
    %686 = vmatprep.subr.mxu0 0.0
    %687 = vmatpush1.msra.mxu0 0.0
    %688 = vmatprep.subr.mxu0 0.0
    %689 = vmatpush1.msra.mxu0 0.0
    %690 = vmatprep.subr.mxu0 0.0
    %691 = vmatpush1.msra.mxu0 0.0
    %692 = vmatprep.subr.mxu0 0.0
    %693 = vmatpush1.msra.mxu0 0.0
    %694 = vmatprep.subr.mxu0 0.0
    %695 = vmatpush1.msra.mxu0 0.0
    %696 = vmatprep.subr.mxu0 0.0
    %697 = vmatpush1.msra.mxu0 0.0
    %698 = vmatprep.subr.mxu0 0.0
    %699 = vmatpush1.msra.mxu0 %v600
    %700 = vmatprep.subr.mxu0 0.0
    %701 = vmatpush1.msra.mxu0 %v599
    %702 = vmatprep.subr.mxu0 0.0
    %703 = vmatpush1.msra.mxu0 %v598
    %704 = vmatprep.subr.mxu0 0.0
    %705 = vmatpush1.msra.mxu0 %v597
    %706 = vmatprep.subr.mxu0 0.0
    %707 = vmatpush1.msra.mxu0 %v596
    %708 = vmatprep.subr.mxu0 0.0
    %709 = vmatpush1.msra.mxu0 %v595
    %710 = vmatprep.subr.mxu0 0.0
    %711 = vmatpush1.msra.mxu0 %v594
    %712 = vmatprep.subr.mxu0 0.0
    %713 = vmatpush1.msra.mxu0 %v593
    %714 = vmatprep.subr.mxu0 0.0
    %715 = vmatpush2.msra.mxu0 0.0
    %716 = vmatprep.subr.mxu0 0.0
    %717 = vmatpush2.msra.mxu0 0.0
    %718 = vmatprep.subr.mxu0 0.0
    %719 = vmatpush2.msra.mxu0 0.0
    %720 = vmatprep.subr.mxu0 0.0
    %721 = vmatpush2.msra.mxu0 0.0
    %722 = vmatprep.subr.mxu0 0.0
    %723 = vmatpush2.msra.mxu0 0.0
    %724 = vmatprep.subr.mxu0 0.0
    %725 = vmatpush2.msra.mxu0 0.0
    %726 = vmatprep.subr.mxu0 0.0
    %727 = vmatpush2.msra.mxu0 0.0
    %728 = vmatprep.subr.mxu0 0.0
    %729 = vmatpush2.msra.mxu0 0.0
    %730 = vmatprep.subr.mxu0 0.0
    %731 = vmatpush2.msra.mxu0 0.0
    %732 = vmatprep.subr.mxu0 0.0
    %733 = vmatpush2.msra.mxu0 0.0
    %734 = vmatprep.subr.mxu0 0.0
    %735 = vmatpush2.msra.mxu0 0.0
    %736 = vmatprep.subr.mxu0 0.0
    %737 = vmatpush2.msra.mxu0 0.0
    %738 = vmatprep.subr.mxu0 0.0
    %739 = vmatpush2.msra.mxu0 0.0
    %740 = vmatprep.subr.mxu0 0.0
    %741 = vmatpush2.msra.mxu0 0.0
    %742 = vmatprep.subr.mxu0 0.0
    %743 = vmatpush2.msra.mxu0 0.0
    %744 = vmatprep.subr.mxu0 0.0
    %745 = vmatpush2.msra.mxu0 0.0
    %746 = vmatprep.mubr.f32.mxu0 0.0
    %747 = vmatmul.mubr.f32.gmra.mxu0 %v680
    %v748 = vpop.f32.mrf.mxu0
    %v749 = vadd.f32 %v676, %v748
    %v750 = vpop.f32.mrf.mxu0
    %751 = vdwg.mxu0
    %v752 = vld [vmem:[%s11] sm:$0x1]
    %v753 = vadd.f32 %v749, %v752
    %v754 = vtanh.pop %v753
    %v755 = vld [vmem:[%s12] sm:$0xff]
    %v756 = vld [vmem:[%s12 + $0x8] sm:$0xff]
    %v757 = vld [vmem:[%s12 + $0x10] sm:$0xff]
    %v758 = vld [vmem:[%s12 + $0x18] sm:$0xff]
    %v759 = vld [vmem:[%s13] sm:$0x1]
    %v761 = vsel %vm95, %v754, 0
    %763 = vmatprep.subr.mxu0 0.0
    %764 = vmatpush1.msra.mxu0 0.0
    %765 = vmatprep.subr.mxu0 0.0
    %766 = vmatpush1.msra.mxu0 0.0
    %767 = vmatprep.subr.mxu0 0.0
    %768 = vmatpush1.msra.mxu0 0.0
    %769 = vmatprep.subr.mxu0 0.0
    %770 = vmatpush1.msra.mxu0 0.0
    %771 = vmatprep.subr.mxu0 0.0
    %772 = vmatpush1.msra.mxu0 0.0
    %773 = vmatprep.subr.mxu0 0.0
    %774 = vmatpush1.msra.mxu0 0.0
    %775 = vmatprep.subr.mxu0 0.0
    %776 = vmatpush1.msra.mxu0 0.0
    %777 = vmatprep.subr.mxu0 0.0
    %778 = vmatpush1.msra.mxu0 0.0
    %779 = vmatprep.subr.mxu0 0.0
    %780 = vmatpush1.msra.mxu0 0.0
    %781 = vmatprep.subr.mxu0 0.0
    %782 = vmatpush1.msra.mxu0 0.0
    %783 = vmatprep.subr.mxu0 0.0
    %784 = vmatpush1.msra.mxu0 0.0
    %785 = vmatprep.subr.mxu0 0.0
    %786 = vmatpush1.msra.mxu0 0.0
    %787 = vmatprep.subr.mxu0 0.0
    %788 = vmatpush1.msra.mxu0 %v758
    %789 = vmatprep.subr.mxu0 0.0
    %790 = vmatpush1.msra.mxu0 %v757
    %791 = vmatprep.subr.mxu0 0.0
    %792 = vmatpush1.msra.mxu0 %v756
    %793 = vmatprep.subr.mxu0 0.0
    %794 = vmatpush1.msra.mxu0 %v755
    %795 = vmatprep.subr.mxu0 0.0
    %796 = vmatpush2.msra.mxu0 0.0
    %797 = vmatprep.subr.mxu0 0.0
    %798 = vmatpush2.msra.mxu0 0.0
    %799 = vmatprep.subr.mxu0 0.0
    %800 = vmatpush2.msra.mxu0 0.0
    %801 = vmatprep.subr.mxu0 0.0
    %802 = vmatpush2.msra.mxu0 0.0
    %803 = vmatprep.subr.mxu0 0.0
    %804 = vmatpush2.msra.mxu0 0.0
    %805 = vmatprep.subr.mxu0 0.0
    %806 = vmatpush2.msra.mxu0 0.0
    %807 = vmatprep.subr.mxu0 0.0
    %808 = vmatpush2.msra.mxu0 0.0
    %809 = vmatprep.subr.mxu0 0.0
    %810 = vmatpush2.msra.mxu0 0.0
    %811 = vmatprep.subr.mxu0 0.0
    %812 = vmatpush2.msra.mxu0 0.0
    %813 = vmatprep.subr.mxu0 0.0
    %814 = vmatpush2.msra.mxu0 0.0
    %815 = vmatprep.subr.mxu0 0.0
    %816 = vmatpush2.msra.mxu0 0.0
    %817 = vmatprep.subr.mxu0 0.0
    %818 = vmatpush2.msra.mxu0 0.0
    %819 = vmatprep.subr.mxu0 0.0
    %820 = vmatpush2.msra.mxu0 0.0
    %821 = vmatprep.subr.mxu0 0.0
    %822 = vmatpush2.msra.mxu0 0.0
    %823 = vmatprep.subr.mxu0 0.0
    %824 = vmatpush2.msra.mxu0 0.0
    %825 = vmatprep.subr.mxu0 0.0
    %826 = vmatpush2.msra.mxu0 0.0
    %827 = vmatprep.mubr.f32.mxu0 0.0
    %828 = vmatmul.mubr.f32.gmra.mxu0 %v761
    %v829 = vpop.f32.mrf.mxu0
    %v830 = vadd.f32 %v759, %v829
    %v831 = vpop.f32.mrf.mxu0
    %832 = vdwg.mxu0
    %vm833 = vcmask 401408
    %v834 = vsel %vm833, %v830, -inf
    %835 = vmax.xlane.f32.xlu0 %v834
    %v836 = vpop.xlane.xlu0 %835
    %v837 = vsub.f32 %v830, %v836
    %v838 = vmul.f32 %v837, 1.442695
    %v839 = vpow.pop %v838
    %v840 = vsel %vm833, %v839, 0.0
    %841 = vadd.xlane.f32.xlu0 %v840
    %v842 = vpop.xlane.xlu0 %841
    %v843 = vlog2.pop %v842
    %v844 = vmul.f32 %v843, 0.6931472
    %v845 = vsub.f32 %v837, %v844
    %846 = vst.msk [vmem:[#allocation5] sm:$0x1] %vm833, %v845
    // Predicated region
    $region58: #{tpu_custom_call.1} parent=1 // pred_check
      _
    $region59: #{tpu_custom_call.1} parent=1 // pred_check_branch
      %848 = sbr.rel (0) target = $region61
    $region60: #{tpu_custom_call.1} parent=1 // pred_region
      %s850 = ssub.s32 16, 16
      %851 = vsyncadd [#allocation6], %s850
      %s853 = sshll.u32 [#allocation5], 4
      %s854 = int_to_ptr.vmem [resolvable:$true] %s853
      %856 = dma.vmem_to_hbm [thread:$0]  %s854, 16, %s14, [#allocation6]
    $region61: #{tpu_custom_call.1} parent=1 // pred_fallthru
      _
    // Predicated region
    $region62: #{tpu_custom_call.1} parent=1 // pred_check
      _
    $region63: #{tpu_custom_call.1} parent=1 // pred_check_branch
      %858 = sbr.rel (0) target = $region65
    $region64: #{tpu_custom_call.1} parent=1 // pred_region
      %s860 = ssub.s32 16, 16
      %861 = vsyncadd [#allocation8], %s860
      %s863 = sshll.u32 [#allocation7], 4
      %s864 = int_to_ptr.vmem [resolvable:$true] %s863
      %866 = dma.vmem_to_hbm [thread:$0]  %s864, 16, %s15, [#allocation8]
    $region65: #{tpu_custom_call.1} parent=1 // pred_fallthru
      _
    // Predicated region
    $region66: #{tpu_custom_call.1} parent=1 // pred_check
      _
    $region67: #{tpu_custom_call.1} parent=1 // pred_check_branch
      %868 = sbr.rel (0) target = $region69
    $region68: #{tpu_custom_call.1} parent=1 // pred_region
      %s870 = ssub.s32 16, 16
      %871 = vsyncadd [#allocation8], %s870
      %s873 = sshll.u32 [#allocation9], 4
      %s874 = int_to_ptr.vmem [resolvable:$true] %s873
      %876 = dma.vmem_to_hbm [thread:$0]  %s874, 16, %s16, [#allocation8]
    $region69: #{tpu_custom_call.1} parent=1 // pred_fallthru
      _
    // Predicated region
    $region70: #{tpu_custom_call.1} parent=1 // pred_check
      _
    $region71: #{tpu_custom_call.1} parent=1 // pred_check_branch
      %878 = sbr.rel (0) target = $region73
    $region72: #{tpu_custom_call.1} parent=1 // pred_region
      %879 = dma.done [#allocation6], 16
    $region73: #{tpu_custom_call.1} parent=1 // pred_fallthru
      _
    // Predicated region
    $region74: #{tpu_custom_call.1} parent=1 // pred_check
      _
    $region75: #{tpu_custom_call.1} parent=1 // pred_check_branch
      %881 = sbr.rel (0) target = $region77
    $region76: #{tpu_custom_call.1} parent=1 // pred_region
      %882 = dma.done [#allocation8], 16
    $region77: #{tpu_custom_call.1} parent=1 // pred_fallthru
      _
    // Predicated region
    $region78: #{tpu_custom_call.1} parent=1 // pred_check
      _
    $region79: #{tpu_custom_call.1} parent=1 // pred_check_branch
      %884 = sbr.rel (0) target = $region81
    $region80: #{tpu_custom_call.1} parent=1 // pred_region
      %885 = dma.done [#allocation8], 16
    $region81: #{tpu_custom_call.1} parent=1 // pred_fallthru
      _
    %886 = vsyncpa [#allocation6], 1
    %887 = vsyncpa [#allocation8], 1

</llo_original>
